<compile_context>
chip_gen: v7x
topology: tpu7x:2x2x1
jax: 0.10.0
libtpu: 0.0.40
codegen_flags: <defaults>
</compile_context>

<pallas_src>
import functools

import jax
import jax.numpy as jnp
from jax.experimental import pallas as pl
from jax.experimental.pallas import tpu as pltpu


# ---------------------------------------------------------------------------
# helpers
# ---------------------------------------------------------------------------
def _round_up(x, m):
    return -(-x // m) * m


def _cdiv(a, b):
    return -(-a // b)


def _tpu_vmem_capacity_bytes():
    try:
        return int(pltpu.get_tpu_info().vmem_capacity_bytes)
    except Exception:
        return None


def _preferred_l_tile():
    cap = _tpu_vmem_capacity_bytes()
    if cap is not None and cap <= 64 * 1024 * 1024:
        return 512           # v7x: 64 MiB VMEM -> smaller length tiles
    return 2048              # v5e / v6e: 128 MiB VMEM -> larger tiles amortize grid overhead


def _vmem_limit_bytes():
    cap = _tpu_vmem_capacity_bytes()
    if cap is None:
        return None
    return int(min(cap * 3 // 4, 96 * 1024 * 1024))


# ---------------------------------------------------------------------------
# Pallas kernel: stride-1 VALID conv on one (batch, length-tile) grid cell
# ---------------------------------------------------------------------------
def _conv1d_s1_kernel(x_ref, halo_ref, w_ref, b_ref, o_ref, *, K, L_TILE, fuse_taps):
    # x_ref:    (1, C_in, L_TILE)   current length tile (compute dtype, e.g. bf16)
    # halo_ref: (1, 1, C_in, HALO)  the K-1 samples that follow this tile
    # w_ref:    (C_out, K*C_in)     if fuse_taps else (K, C_out, C_in)
    # b_ref:    (C_out, 1)          float32 (no transpose needed in-kernel)
    # o_ref:    (1, C_out, L_TILE)
    x_full = jnp.concatenate([x_ref[0], halo_ref[0, 0]], axis=-1)      # (C_in, L_TILE + HALO)
    if fuse_taps:
        # K unit-stride shifted slices -> one big MXU contraction over K*C_in.
        patch = jnp.concatenate([x_full[:, k:k + L_TILE] for k in range(K)], axis=0)
        acc = jnp.dot(w_ref[...], patch, preferred_element_type=jnp.float32)
    else:
        # per-tap dots; weight is pre-laid-out (K, C_out, C_in) so w_ref[k] is a cheap
        # leading-dim index (no lane extract / relayout per tap).
        acc = jnp.dot(w_ref[0], x_full[:, 0:L_TILE], preferred_element_type=jnp.float32)
        for k in range(1, K):
            acc = acc + jnp.dot(w_ref[k], x_full[:, k:k + L_TILE],
                                preferred_element_type=jnp.float32)
    o_ref[0] = (acc + b_ref[...]).astype(o_ref.dtype)


def conv1d_stride1_pallas(x, w, b, *, compute_dtype=jnp.bfloat16, out_dtype=jnp.float32,
                          l_tile=None, fuse_taps=None):
    """VALID, stride-1 1-D convolution.

    x: (N, C_in, L_in) (already padded as needed), w: (C_out, C_in, K), b: (C_out,).
    Returns (N, C_out, L_in - K + 1) in out_dtype (f32 accumulation on the MXU).
    """
    N, C_in, L_in = map(int, x.shape)
    C_out, C_in_w, K = map(int, w.shape)
    assert C_in_w == C_in and tuple(b.shape) == (C_out,)
    L_out = L_in - K + 1
    assert L_out >= 1

    if l_tile is None:
        l_tile = _preferred_l_tile()
    l_tile = max(128, min(int(l_tile), _round_up(L_out, 128)))
    assert l_tile % 128 == 0
    num_tiles = _cdiv(L_out, l_tile)
    L_out_pad = num_tiles * l_tile
    halo = max(K - 1, 1)
    assert halo <= l_tile, "kernel_size - 1 must fit within one length tile"
    C_out_pad = _round_up(C_out, 8)
    if fuse_taps is None:
        fuse_taps = (C_in * K) <= 1024   # fuse taps when contraction stays small vs. MXU width

    # ---- inputs: contiguous main tiles + a tiny per-tile halo (K-1 samples) ----
    L_need = L_out_pad + halo
    x_ext = x
    if L_need > L_in:
        x_ext = jnp.pad(x_ext, ((0, 0), (0, 0), (0, L_need - L_in)))
    x_main = x_ext[:, :, :L_out_pad].astype(compute_dtype)               # (N, C_in, L_out_pad)

    x_tail = x_ext[:, :, l_tile:]
    tail_len = int(x_tail.shape[-1])
    if tail_len < L_out_pad:
        x_tail = jnp.pad(x_tail, ((0, 0), (0, 0), (0, L_out_pad - tail_len)))
    else:
        x_tail = x_tail[:, :, :L_out_pad]
    x_halo = x_tail.reshape(N, C_in, num_tiles, l_tile)[:, :, :, :halo]
    x_halo = jnp.transpose(x_halo, (0, 2, 1, 3)).astype(compute_dtype)   # (N, T, C_in, halo)

    # ---- weight re-layout (once, in the wrapper) ----
    if fuse_taps:
        w_arg = jnp.transpose(w, (0, 2, 1)).reshape(C_out, K * C_in)     # [co, k*C_in + ci]
        if C_out_pad != C_out:
            w_arg = jnp.pad(w_arg, ((0, C_out_pad - C_out), (0, 0)))
        w_arg = w_arg.astype(compute_dtype)
        w_spec = pl.BlockSpec((C_out_pad, K * C_in), lambda n, j: (0, 0))
    else:
        w_arg = jnp.transpose(w, (2, 0, 1))                              # (K, C_out, C_in)
        if C_out_pad != C_out:
            w_arg = jnp.pad(w_arg, ((0, 0), (0, C_out_pad - C_out), (0, 0)))
        w_arg = w_arg.astype(compute_dtype)
        w_spec = pl.BlockSpec((K, C_out_pad, C_in), lambda n, j: (0, 0, 0))

    b_arg = b.astype(jnp.float32).reshape(C_out, 1)
    if C_out_pad != C_out:
        b_arg = jnp.pad(b_arg, ((0, C_out_pad - C_out), (0, 0)))

    kernel = functools.partial(_conv1d_s1_kernel, K=K, L_TILE=l_tile, fuse_taps=fuse_taps)
    itemsize = jnp.dtype(compute_dtype).itemsize
    cost = pl.CostEstimate(
        flops=2 * N * C_out_pad * C_in * K * L_out_pad,
        transcendentals=0,
        bytes_accessed=(x_main.size + x_halo.size + w_arg.size) * itemsize
        + b_arg.size * 4 + N * C_out_pad * L_out_pad * jnp.dtype(out_dtype).itemsize,
    )

    out = pl.pallas_call(
        kernel,
        out_shape=jax.ShapeDtypeStruct((N, C_out_pad, L_out_pad), out_dtype),
        grid=(N, num_tiles),
        in_specs=[
            pl.BlockSpec((1, C_in, l_tile), lambda n, j: (n, 0, j)),
            pl.BlockSpec((1, 1, C_in, halo), lambda n, j: (n, j, 0, 0)),
            w_spec,
            pl.BlockSpec((C_out_pad, 1), lambda n, j: (0, 0)),
        ],
        out_specs=pl.BlockSpec((1, C_out_pad, l_tile), lambda n, j: (n, 0, j)),
        compiler_params=pltpu.CompilerParams(
            dimension_semantics=("parallel", "parallel"),
            vmem_limit_bytes=_vmem_limit_bytes()),
        cost_estimate=cost,
    )(x_main, x_halo, w_arg, b_arg)
    return out[:, :C_out, :L_out]


# ---------------------------------------------------------------------------
# wrappers that reduce every variant to the stride-1 kernel
# ---------------------------------------------------------------------------
def _polyphase_conv(x, phase_filters, phase_offsets, bias, L_out, *,
                    compute_dtype=jnp.bfloat16):
    """y[n, co, s*q + r] = b[co] + sum_{ci,m} phase_filters[r][co,ci,m] * x_z[n, ci, q + off_r + m]
    (x_z = x zero-extended outside [0, L)).  Runs ONE stride-1 conv with the s phase filters
    stacked along C_out, then interleaves the phases; crops the last dim to L_out."""
    s = len(phase_filters)
    N, C_in, _ = map(int, x.shape)
    C_out = int(phase_filters[0].shape[0])
    d_min = min(phase_offsets)
    M_total = max(int(wf.shape[-1]) + (d - d_min) for wf, d in zip(phase_filters, phase_offsets))

    W = jnp.zeros((s, C_out, C_in, M_total), phase_filters[0].dtype)
    for r, (wf, d) in enumerate(zip(phase_filters, phase_offsets)):
        off = d - d_min
        W = W.at[r, :, :, off:off + int(wf.shape[-1])].set(wf)
    W = W.reshape(s * C_out, C_in, M_total)
    b_poly = jnp.tile(jnp.asarray(bias).reshape(C_out), (s,))            # row r*C_out+co -> b[co]

    Q = _cdiv(L_out, s)
    Lc = Q + M_total - 1
    # conv input index i maps to x[i + d_min], zero outside [0, L)
    left_pad, left_crop = max(-d_min, 0), max(d_min, 0)
    xin = x[:, :, left_crop:]
    if left_pad:
        xin = jnp.pad(xin, ((0, 0), (0, 0), (left_pad, 0)))
    cur = int(xin.shape[-1])
    if cur < Lc:
        xin = jnp.pad(xin, ((0, 0), (0, 0), (0, Lc - cur)))
    elif cur > Lc:
        xin = xin[:, :, :Lc]

    y = conv1d_stride1_pallas(xin, W, b_poly, compute_dtype=compute_dtype)   # (N, s*C_out, Q)
    y = y.reshape(N, s, C_out, Q).transpose(0, 2, 3, 1).reshape(N, C_out, Q * s)
    return y[:, :, :L_out]


def conv1d_forward(x, w, b, *, stride=1, padding=(0, 0), compute_dtype=jnp.bfloat16):
    """PyTorch Conv1d forward (explicit zero padding).  Stride > 1 is folded into channels in
    the wrapper so the kernel never does strided lane slices."""
    s = int(stride)
    if padding[0] or padding[1]:
        x = jnp.pad(x, ((0, 0), (0, 0), (int(padding[0]), int(padding[1]))))
    if s == 1:
        return conv1d_stride1_pallas(x, w, b, compute_dtype=compute_dtype)
    N, C_in, L_pad = map(int, x.shape)
    C_out, _, K = map(int, w.shape)
    L_out = (L_pad - K) // s + 1
    Kp = _cdiv(K, s)
    J = L_out + Kp - 1
    need = s * J
    if need > L_pad:
        x = jnp.pad(x, ((0, 0), (0, 0), (0, need - L_pad)))
    else:
        x = x[:, :, :need]
    xf = x.reshape(N, C_in, J, s).transpose(0, 3, 1, 2).reshape(N, s * C_in, J)
    w_ext = w if s * Kp == K else jnp.pad(w, ((0, 0), (0, 0), (0, s * Kp - K)))
    wf = w_ext.reshape(C_out, C_in, Kp, s).transpose(0, 3, 1, 2).reshape(C_out, s * C_in, Kp)
    return conv1d_stride1_pallas(xf, wf, b, compute_dtype=compute_dtype)


def conv_transpose1d_forward(x, w, b, *, stride, padding, output_padding,
                             compute_dtype=jnp.bfloat16):
    """PyTorch ConvTranspose1d forward via output polyphase (no zero-dilated input).
    w: (C_in, C_out, K) (torch layout), b: (C_out,)."""
    s = int(stride)
    _, _, L = map(int, x.shape)
    C_in, C_out, K = map(int, w.shape)
    L_out = (L - 1) * s - 2 * padding + K + output_padding
    wf = jnp.flip(jnp.transpose(w, (1, 0, 2)), axis=-1)                  # (C_out, C_in, K)
    lo = K - 1 - padding
    phase_filters, phase_offsets = [], []
    for r in range(s):
        k0 = (lo - r) % s
        if k0 < K:
            phase_filters.append(wf[:, :, k0::s])
            phase_offsets.append((r + k0 - lo) // s)
        else:
            phase_filters.append(jnp.zeros((C_out, C_in, 1), wf.dtype))
            phase_offsets.append(0)
    return _polyphase_conv(x, phase_filters, phase_offsets, b, L_out,
                           compute_dtype=compute_dtype)


def _upsample_conv1d(x, w, b, *, upsample, pad, compute_dtype=jnp.bfloat16):
    """nearest-Upsample(u) -> ConstantPad1d(pad) -> Conv1d(stride=1), WITHOUT materializing the
    u*L upsampled array: output polyphase with per-phase collapsed (summed) filters."""
    u = int(upsample)
    _, C_in, L = map(int, x.shape)
    C_out, _, K = map(int, w.shape)
    L_out = u * L + 2 * pad - K + 1
    phase_filters, phase_offsets = [], []
    for r in range(u):
        g = [(r + k - pad) // u for k in range(K)]
        off, M = g[0], g[-1] - g[0] + 1
        wr = jnp.zeros((C_out, C_in, M), w.dtype)
        for k in range(K):
            wr = wr.at[:, :, g[k] - off].add(w[:, :, k])
        phase_filters.append(wr)
        phase_offsets.append(off)
    return _polyphase_conv(x, phase_filters, phase_offsets, b, L_out,
                           compute_dtype=compute_dtype)


# ---------------------------------------------------------------------------
# modules
# ---------------------------------------------------------------------------
class PhaseRemove:
    """Port of cond_pulse2pulse.PhaseRemove: its forward body is `pass` in the source."""

    def __call__(self, x):
        # TODO(synk): PhaseRemove.forward is `pass` (returns None) in the PyTorch source —
        # there is no computation to translate to a kernel.
        return None


class Transpose1dLayer:
    """JAX/Pallas port of cond_pulse2pulse.Transpose1dLayer (forward pass only)."""

    def __init__(self, in_channels, out_channels, kernel_size, stride,
                 padding=11, upsample=None, output_padding=1, key=None,
                 compute_dtype=jnp.bfloat16):
        self.in_channels = in_channels
        self.out_channels = out_channels
        self.kernel_size = kernel_size
        self.stride = stride
        self.padding = padding
        self.upsample = upsample
        self.output_padding = output_padding
        self.compute_dtype = compute_dtype

        key = jax.random.PRNGKey(0) if key is None else key
        k1, k2, k3, k4 = jax.random.split(key, 4)
        scale = 0.1
        # Conv1d: weight (out, in, K), bias (out,)   (the Conv1d in the source has padding=0)
        self.conv1d_w = scale * jax.random.normal(
            k1, (out_channels, in_channels, kernel_size), jnp.float32)
        self.conv1d_b = scale * jax.random.normal(k2, (out_channels,), jnp.float32)
        # ConvTranspose1d: weight (in, out, K), bias (out,)
        self.convT_w = scale * jax.random.normal(
            k3, (in_channels, out_channels, kernel_size), jnp.float32)
        self.convT_b = scale * jax.random.normal(k4, (out_channels,), jnp.float32)

    def __call__(self, x):
        if self.upsample:
            u = int(self.upsample)
            p = self.kernel_size // 2        # ConstantPad1d(kernel_size//2, value=0)
            if self.stride == 1:
                # fused nearest-upsample + pad + conv (no u*L array ever hits HBM)
                return _upsample_conv1d(x, self.conv1d_w, self.conv1d_b,
                                        upsample=u, pad=p, compute_dtype=self.compute_dtype)
            # TODO(synk): also fuse the nearest-upsample for stride != 1 (unused by the model).
            x_up = jnp.repeat(x, u, axis=-1)
            return conv1d_forward(x_up, self.conv1d_w, self.conv1d_b,
                                  stride=self.stride, padding=(p, p),
                                  compute_dtype=self.compute_dtype)
        return conv_transpose1d_forward(x, self.convT_w, self.convT_b,
                                        stride=self.stride, padding=self.padding,
                                        output_padding=self.output_padding,
                                        compute_dtype=self.compute_dtype)


# ---------------------------------------------------------------------------
# demo / checks
# ---------------------------------------------------------------------------
if __name__ == "__main__":
    key = jax.random.PRNGKey(0)
    kx, kp1, kp2 = jax.random.split(key, 3)

    N, C_in, C_out, L = 2, 4, 8, 16
    x = jax.random.normal(kx, (N, C_in, L), jnp.float32)

    # ---- Branch 1: upsample path (Upsample -> ConstantPad1d -> Conv1d, stride=1) ----
    layer_up = Transpose1dLayer(C_in, C_out, kernel_size=5, stride=1,
                                padding=11, upsample=2, output_padding=1, key=kp1)
    y_up = jax.block_until_ready(layer_up(x))
    x_ref = jnp.pad(jnp.repeat(x, 2, axis=-1), ((0, 0), (0, 0), (2, 2)))
    ref_up = jax.lax.conv_general_dilated(
        x_ref, layer_up.conv1d_w, window_strides=(1,), padding="VALID",
        dimension_numbers=("NCH", "OIH", "NCH")) + layer_up.conv1d_b[None, :, None]
    assert y_up.shape == (N, C_out, 32), y_up.shape
    assert jnp.allclose(y_up, ref_up, atol=3e-2, rtol=3e-2), "upsample-branch mismatch"

    # ---- Branch 2: ConvTranspose1d path (polyphase, stride=2) ----
    layer_tr = Transpose1dLayer(C_in, C_out, kernel_size=5, stride=2,
                                padding=2, upsample=None, output_padding=1, key=kp2)
    y_tr = jax.block_until_ready(layer_tr(x))
    w_t = jnp.flip(jnp.transpose(layer_tr.convT_w, (1, 0, 2)), axis=-1)
    ref_tr = jax.lax.conv_general_dilated(
        x, w_t, window_strides=(1,), padding=[(2, 3)], lhs_dilation=(2,),
        dimension_numbers=("NCH", "OIH", "NCH")) + layer_tr.convT_b[None, :, None]
    assert y_tr.shape == (N, C_out, 32), y_tr.shape
    assert jnp.allclose(y_tr, ref_tr, atol=3e-2, rtol=3e-2), "transpose-conv-branch mismatch"

    # ---- Strided Conv1d via wrapper-side phase folding ----
    y_s2 = jax.block_until_ready(conv1d_forward(
        x, layer_up.conv1d_w, layer_up.conv1d_b, stride=2, padding=(2, 2)))
    ref_s2 = jax.lax.conv_general_dilated(
        x, layer_up.conv1d_w, window_strides=(2,), padding=[(2, 2)],
        dimension_numbers=("NCH", "OIH", "NCH")) + layer_up.conv1d_b[None, :, None]
    assert y_s2.shape == ref_s2.shape == (N, C_out, 8)
    assert jnp.allclose(y_s2, ref_s2, atol=3e-2, rtol=3e-2), "strided-conv mismatch"

    # ---- Both kernel variants: fused-tap contraction vs per-tap loop ----
    xp = jnp.pad(x, ((0, 0), (0, 0), (2, 2)))
    y_fuse = conv1d_stride1_pallas(xp, layer_up.conv1d_w, layer_up.conv1d_b, fuse_taps=True)
    y_loop = conv1d_stride1_pallas(xp, layer_up.conv1d_w, layer_up.conv1d_b, fuse_taps=False)
    jax.block_until_ready((y_fuse, y_loop))
    ref_s1 = jax.lax.conv_general_dilated(
        xp, layer_up.conv1d_w, window_strides=(1,), padding="VALID",
        dimension_numbers=("NCH", "OIH", "NCH")) + layer_up.conv1d_b[None, :, None]
    assert jnp.allclose(y_fuse, ref_s1, atol=3e-2, rtol=3e-2), "fused-tap kernel mismatch"
    assert jnp.allclose(y_loop, ref_s1, atol=3e-2, rtol=3e-2), "per-tap kernel mismatch"

    # ---- PhaseRemove: forward is `pass` in the source ----
    assert PhaseRemove()(x) is None

    print("KERNEL_OK")
</pallas_src>

<mosaic_0001>
module attributes {stable_mosaic.version = 11 : i64} {
  func.func @_conv1d_s1_kernel(%arg0: i32, %arg1: i32, %arg2: memref<1x4x128xbf16, #tpu.memory_space<vmem>>, %arg3: memref<1x1x4x2xbf16, #tpu.memory_space<vmem>>, %arg4: memref<16x12xbf16, #tpu.memory_space<vmem>>, %arg5: memref<16x1xf32, #tpu.memory_space<vmem>>, %arg6: memref<1x16x128xf32, #tpu.memory_space<vmem>>) attributes {dimension_semantics = [#tpu.dimension_semantics<parallel>, #tpu.dimension_semantics<parallel>], iteration_bounds = array<i64: 2, 1>, scalar_prefetch = 0 : i64, scratch_operands = 0 : i64, tpu.core_type = #tpu.core_type<tc>, window_params = [{transform_indices = @transform_0, window_bounds = array<i64: 1, 4, 128>}, {transform_indices = @transform_1, window_bounds = array<i64: 1, 1, 4, 2>}, {pipeline_mode = #tpu.pipeline_mode<synchronous>, transform_indices = @transform_2, window_bounds = array<i64: 16, 12>}, {pipeline_mode = #tpu.pipeline_mode<synchronous>, transform_indices = @transform_3, window_bounds = array<i64: 16, 1>}, {transform_indices = @transform_4, window_bounds = array<i64: 1, 16, 128>}]} {
    %c0 = arith.constant 0 : index
    %c0_0 = arith.constant 0 : index
    %c0_1 = arith.constant 0 : index
    %0 = vector.load %arg2[%c0, %c0_0, %c0_1] : memref<1x4x128xbf16, #tpu.memory_space<vmem>>, vector<1x4x128xbf16>
    %1 = vector.shape_cast %0 : vector<1x4x128xbf16> to vector<4x128xbf16>
    %c0_2 = arith.constant 0 : index
    %c0_3 = arith.constant 0 : index
    %c0_4 = arith.constant 0 : index
    %c0_5 = arith.constant 0 : index
    %2 = vector.load %arg3[%c0_2, %c0_3, %c0_4, %c0_5] : memref<1x1x4x2xbf16, #tpu.memory_space<vmem>>, vector<1x1x4x2xbf16>
    %3 = vector.shape_cast %2 : vector<1x1x4x2xbf16> to vector<4x2xbf16>
    %4 = tpu.concatenate %1, %3 in 1 : vector<4x128xbf16>, vector<4x2xbf16> -> vector<4x130xbf16>
    %5 = vector.extract_strided_slice %4 {offsets = [0, 0], sizes = [4, 128], strides = [1, 1]} : vector<4x130xbf16> to vector<4x128xbf16>
    %6 = vector.extract_strided_slice %4 {offsets = [0, 1], sizes = [4, 128], strides = [1, 1]} : vector<4x130xbf16> to vector<4x128xbf16>
    %7 = vector.extract_strided_slice %4 {offsets = [0, 2], sizes = [4, 128], strides = [1, 1]} : vector<4x130xbf16> to vector<4x128xbf16>
    %8 = tpu.concatenate %5, %6, %7 in 0 : vector<4x128xbf16>, vector<4x128xbf16>, vector<4x128xbf16> -> vector<12x128xbf16>
    %c0_6 = arith.constant 0 : index
    %c0_7 = arith.constant 0 : index
    %9 = vector.load %arg4[%c0_6, %c0_7] : memref<16x12xbf16, #tpu.memory_space<vmem>>, vector<16x12xbf16>
    %cst = arith.constant dense<0.000000e+00> : vector<16x128xf32>
    %10 = tpu.matmul %9, %8, %cst {dimension_numbers = #tpu.dot_dimension_numbers<[1], [0], [0], [1], [0, 0, 1, 1], [], []>} : vector<16x12xbf16>, vector<12x128xbf16>, vector<16x128xf32> -> vector<16x128xf32>
    %c0_8 = arith.constant 0 : index
    %c0_9 = arith.constant 0 : index
    %11 = vector.load %arg5[%c0_8, %c0_9] : memref<16x1xf32, #tpu.memory_space<vmem>>, vector<16x1xf32>
    %12 = vector.broadcast %11 : vector<16x1xf32> to vector<16x128xf32>
    %13 = arith.addf %10, %12 : vector<16x128xf32>
    %c0_10 = arith.constant 0 : index
    %c0_11 = arith.constant 0 : index
    %c0_12 = arith.constant 0 : index
    %14 = vector.load %arg6[%c0_10, %c0_11, %c0_12] : memref<1x16x128xf32, #tpu.memory_space<vmem>>, vector<1x16x128xf32>
    %15 = vector.shape_cast %14 : vector<1x16x128xf32> to vector<16x128xf32>
    %16 = vector.shape_cast %13 : vector<16x128xf32> to vector<1x16x128xf32>
    tpu.vector_store %arg6[%c0_10, %c0_11, %c0_12], %16 {strides = array<i32>} : memref<1x16x128xf32, #tpu.memory_space<vmem>>, vector<1x16x128xf32>,
    return
  }
  func.func @transform_0(%arg0: i32, %arg1: i32) -> (i32, i32, i32) {
    %c0_i32 = arith.constant 0 : i32
    %c0_i32_0 = arith.constant 0 : i32
    return %arg0, %c0_i32, %arg1 : i32, i32, i32
  }
  func.func @transform_1(%arg0: i32, %arg1: i32) -> (i32, i32, i32, i32) {
    %c0_i32 = arith.constant 0 : i32
    %c0_i32_0 = arith.constant 0 : i32
    %c0_i32_1 = arith.constant 0 : i32
    return %arg0, %arg1, %c0_i32, %c0_i32_0 : i32, i32, i32, i32
  }
  func.func @transform_2(%arg0: i32, %arg1: i32) -> (i32, i32) {
    %c0_i32 = arith.constant 0 : i32
    %c0_i32_0 = arith.constant 0 : i32
    %c0_i32_1 = arith.constant 0 : i32
    return %c0_i32, %c0_i32_0 : i32, i32
  }
  func.func @transform_3(%arg0: i32, %arg1: i32) -> (i32, i32) {
    %c0_i32 = arith.constant 0 : i32
    %c0_i32_0 = arith.constant 0 : i32
    %c0_i32_1 = arith.constant 0 : i32
    return %c0_i32, %c0_i32_0 : i32, i32
  }
  func.func @transform_4(%arg0: i32, %arg1: i32) -> (i32, i32, i32) {
    %c0_i32 = arith.constant 0 : i32
    %c0_i32_0 = arith.constant 0 : i32
    return %arg0, %c0_i32, %arg1 : i32, i32, i32
  }
}

</mosaic_0001>

<llo_original>
// kernel: tpu_custom_call.1
$region0: #{tpu_custom_call.1}
  #allocation0 [shape = 'u32[]', space=smem, size = 0x4, offset = 0x4, fixed_abs, tag = 'smem constant byte address 0x4 - core index']
  #allocation1 [shape = 'u32[144,128]{1,0:T(1,128)}', space=vmem, size = 0x12000, scoped, tag = 'internal scratch']
  %s0 = inlined_call_operand.vmem [shape: bf16[2,4,128], index: 0, kind: input, shape index: {}]
  %s1 = inlined_call_operand.vmem [shape: bf16[2,1,4,2], index: 1, kind: input, shape index: {}]
  %s2 = inlined_call_operand.vmem [shape: bf16[16,12], index: 2, kind: input, shape index: {}]
  %s3 = inlined_call_operand.vmem [shape: f32[16,1], index: 3, kind: input, shape index: {}]
  %s4 = inlined_call_operand.hbm [shape: f32[2,16,128], index: 4, kind: output, shape index: {}]
  %s5 = sld [smem:[#allocation0]]
  $region49: #{tpu_custom_call.1} parent=0
    _
  %s7 = ssub.s32 1, %s5
  %s8 = scalar_select 0, %s7, %s5
  $region1: #{tpu_custom_call.1} parent=0
    #allocation2 [shape = 'u8[16384]{0}', space=vmem, size = 0x4000, scoped, tag = 'output window, operand 0']
    #allocation3 [shape = 's32[2]{0}', space=sflag, size = 0x8, scoped, tag = 'scoped memory for tpu_custom_call.1']
    %9 = vsyncpa [#allocation3], 0
    %s10 = scalar_lea.sflag [#allocation3], 1
    %11 = vsyncpa %s10, 0
    loop: start=0, step=1, limit=4
    $region2: #{tpu_custom_call.1} parent=1 // loop_pre_header
      _
    $region3: #{tpu_custom_call.1} parent=1 // loop_header
      %s13 = sphi 0, %s17
      %p14 = scmp.ge.s32.totalorder %s13, 4
      %s20 = sphi 0, %s32
      %s21 = sphi 0, %s28
      %s22 = sphi 0, %s20
      %s23 = sphi 0, %s21
      %s24 = sphi 0, %s22
      %s25 = sphi 0, %s23
      %s37 = sphi 0, %s39
      %s40 = sphi 0, %s37
      %s41 = sphi 0, %s40
      %s57 = sphi 0, %s41
      %s65 = sphi 0, %s67
      %s68 = sphi 0, %s65
      %s69 = sphi 0, %s68
      %s85 = sphi 0, %s69
      %s89 = sphi 0, %s89
      %s91 = sphi 0, %s89
      %s92 = sphi 0, %s91
      %s106 = sphi 0, %s92
      %s110 = sphi 0, %s110
      %s112 = sphi 0, %s110
      %s113 = sphi 0, %s112
      %s127 = sphi 0, %s113
      %s135 = sphi 0, %s137
      %s138 = sphi 0, %s135
      %s139 = sphi 0, %s138
      %s155 = sphi 0, %s139
    $region4: #{tpu_custom_call.1} parent=1 // loop_header_branch
      %16 = sbr.rel (%p14) target = $region8
    $region5: #{tpu_custom_call.1} parent=1 // loop_body
      %s18 = ssub.s32 %s13, 1
      %s19 = ssub.s32 %s13, 2
      %s26 = sadd.s32 1, %s21
      %p27 = scmp.ge.s32.totalorder %s26, 1
      %s28 = scalar_select %p27, 0, %s26
      %s29 = sadd.s32 1, %s20
      %s30 = scalar_select %p27, %s29, %s20
      %p31 = scmp.ge.s32.totalorder %s30, 2
      %s32 = scalar_select %p31, 0, %s30
      %s33 = ssub.s32 %s20, %s32
      %s34 = ssub.s32 %s21, %s28
      %s35 = sor.u32 %s33, %s34
      %p36 = scmp.eq.s32.totalorder %s35, 0
      %s38 = sadd.s32 %s37, 1
      %s39 = scalar_select %p36, %s37, %s38
      %p42 = pneg %p36
      %p43 = scmp.eq.s32.totalorder %s13, 1
      %p44 = por %p42, %p43
      %p45 = scmp.ne.s32.totalorder %s37, %s40
      %p46 = scmp.eq.s32.totalorder %s13, 0
      %p47 = por %p45, %p46
      %p48 = scmp.ne.s32.totalorder %s37, %s40
      %p49 = scmp.eq.s32.totalorder %s18, 1
      %p50 = por %p48, %p49
      %p51 = scmp.ne.s32.totalorder %s40, %s41
      %p52 = scmp.eq.s32.totalorder %s18, 0
      %p53 = por %p51, %p52
      %p54 = scmp.ne.s32.totalorder %s40, %s41
      %p55 = scmp.eq.s32.totalorder %s19, 1
      %p56 = por %p54, %p55
      %p58 = scmp.ne.s32.totalorder %s41, %s57
      %p59 = scmp.eq.s32.totalorder %s19, 0
      %p60 = por %p58, %p59
      %s61 = ssub.s32 %s20, %s32
      %s62 = ssub.s32 %s21, %s28
      %s63 = sor.u32 %s61, %s62
      %p64 = scmp.eq.s32.totalorder %s63, 0
      %s66 = sadd.s32 %s65, 1
      %s67 = scalar_select %p64, %s65, %s66
      %p70 = pneg %p64
      %p71 = scmp.eq.s32.totalorder %s13, 1
      %p72 = por %p70, %p71
      %p73 = scmp.ne.s32.totalorder %s65, %s68
      %p74 = scmp.eq.s32.totalorder %s13, 0
      %p75 = por %p73, %p74
      %p76 = scmp.ne.s32.totalorder %s65, %s68
      %p77 = scmp.eq.s32.totalorder %s18, 1
      %p78 = por %p76, %p77
      %p79 = scmp.ne.s32.totalorder %s68, %s69
      %p80 = scmp.eq.s32.totalorder %s18, 0
      %p81 = por %p79, %p80
      %p82 = scmp.ne.s32.totalorder %s68, %s69
      %p83 = scmp.eq.s32.totalorder %s19, 1
      %p84 = por %p82, %p83
      %p86 = scmp.ne.s32.totalorder %s69, %s85
      %p87 = scmp.eq.s32.totalorder %s19, 0
      %p88 = por %p86, %p87
      %s90 = sadd.s32 %s89, 1
      %p93 = scmp.eq.s32.totalorder %s13, 1
      %p94 = scmp.ne.s32.totalorder %s89, %s91
      %p95 = scmp.eq.s32.totalorder %s13, 0
      %p96 = por %p94, %p95
      %p97 = scmp.ne.s32.totalorder %s89, %s91
      %p98 = scmp.eq.s32.totalorder %s18, 1
      %p99 = por %p97, %p98
      %p100 = scmp.ne.s32.totalorder %s91, %s92
      %p101 = scmp.eq.s32.totalorder %s18, 0
      %p102 = por %p100, %p101
      %p103 = scmp.ne.s32.totalorder %s91, %s92
      %p104 = scmp.eq.s32.totalorder %s19, 1
      %p105 = por %p103, %p104
      %p107 = scmp.ne.s32.totalorder %s92, %s106
      %p108 = scmp.eq.s32.totalorder %s19, 0
      %p109 = por %p107, %p108
      %s111 = sadd.s32 %s110, 1
      %p114 = scmp.eq.s32.totalorder %s13, 1
      %p115 = scmp.ne.s32.totalorder %s110, %s112
      %p116 = scmp.eq.s32.totalorder %s13, 0
      %p117 = por %p115, %p116
      %p118 = scmp.ne.s32.totalorder %s110, %s112
      %p119 = scmp.eq.s32.totalorder %s18, 1
      %p120 = por %p118, %p119
      %p121 = scmp.ne.s32.totalorder %s112, %s113
      %p122 = scmp.eq.s32.totalorder %s18, 0
      %p123 = por %p121, %p122
      %p124 = scmp.ne.s32.totalorder %s112, %s113
      %p125 = scmp.eq.s32.totalorder %s19, 1
      %p126 = por %p124, %p125
      %p128 = scmp.ne.s32.totalorder %s113, %s127
      %p129 = scmp.eq.s32.totalorder %s19, 0
      %p130 = por %p128, %p129
      %s131 = ssub.s32 %s20, %s32
      %s132 = ssub.s32 %s21, %s28
      %s133 = sor.u32 %s131, %s132
      %p134 = scmp.eq.s32.totalorder %s133, 0
      %s136 = sadd.s32 %s135, 1
      %s137 = scalar_select %p134, %s135, %s136
      %p140 = pneg %p134
      %p141 = scmp.eq.s32.totalorder %s13, 1
      %p142 = por %p140, %p141
      %p143 = scmp.ne.s32.totalorder %s135, %s138
      %p144 = scmp.eq.s32.totalorder %s13, 0
      %p145 = por %p143, %p144
      %p146 = scmp.ne.s32.totalorder %s135, %s138
      %p147 = scmp.eq.s32.totalorder %s18, 1
      %p148 = por %p146, %p147
      %p149 = scmp.ne.s32.totalorder %s138, %s139
      %p150 = scmp.eq.s32.totalorder %s18, 0
      %p151 = por %p149, %p150
      %p152 = scmp.ne.s32.totalorder %s138, %s139
      %p153 = scmp.eq.s32.totalorder %s19, 1
      %p154 = por %p152, %p153
      %p156 = scmp.ne.s32.totalorder %s139, %s155
      %p157 = scmp.eq.s32.totalorder %s19, 0
      %p158 = por %p156, %p157
      %p159 = scmp.le.s32.totalorder 1, %s13
      %p160 = scmp.lt.s32.totalorder %s13, 3
      %p161 = pnand %p159, %p160
      %p162 = pneg %p161
      // Predicated region
      $region9: #{tpu_custom_call.1} parent=5 // pred_check
        _
      $region10: #{tpu_custom_call.1} parent=5 // pred_check_branch
        %164 = sbr.rel (%p161) target = $region12
      $region11: #{tpu_custom_call.1} parent=5 // pred_region
        %s165 = ssub.s32 %s13, 1
        // Predicated region
        $region13: #{tpu_custom_call.1} parent=11 // pred_check
          %p166 = pneg %p102
        $region14: #{tpu_custom_call.1} parent=11 // pred_check_branch
          %168 = sbr.rel (%p166) target = $region16
        $region15: #{tpu_custom_call.1} parent=11 // pred_region
          _
        $region16: #{tpu_custom_call.1} parent=11 // pred_fallthru
          _
        // Predicated region
        $region17: #{tpu_custom_call.1} parent=11 // pred_check
          %p169 = pneg %p123
        $region18: #{tpu_custom_call.1} parent=11 // pred_check_branch
          %171 = sbr.rel (%p169) target = $region20
        $region19: #{tpu_custom_call.1} parent=11 // pred_region
          _
        $region20: #{tpu_custom_call.1} parent=11 // pred_fallthru
          _
      $region12: #{tpu_custom_call.1} parent=5 // pred_fallthru
        _
      %p172 = scmp.lt.s32.totalorder %s13, 2
      // Predicated region
      $region21: #{tpu_custom_call.1} parent=5 // pred_check
        %p173 = pneg %p172
      $region22: #{tpu_custom_call.1} parent=5 // pred_check_branch
        %175 = sbr.rel (%p173) target = $region24
      $region23: #{tpu_custom_call.1} parent=5 // pred_region
        // Predicated region
        $region25: #{tpu_custom_call.1} parent=23 // pred_check
          %p176 = pneg %p47
        $region26: #{tpu_custom_call.1} parent=23 // pred_check_branch
          %178 = sbr.rel (%p176) target = $region28
        $region27: #{tpu_custom_call.1} parent=23 // pred_region
          %p179 = scmp.lt.s32.totalorder %s20, 1
          %s180 = scalar_select %p179, %s20, 1
          %p181 = scmp.lt.s32.totalorder %s21, 0
          %s182 = scalar_select %p181, %s21, 0
          %s183 = sadd.s32 %s182, %s180
          %s184 = smul.addr %s183, 2
          %s185 = scalar_lea.vmem %s0, %s184
        $region28: #{tpu_custom_call.1} parent=23 // pred_fallthru
          _
        // Predicated region
        $region29: #{tpu_custom_call.1} parent=23 // pred_check
          %p186 = pneg %p75
        $region30: #{tpu_custom_call.1} parent=23 // pred_check_branch
          %188 = sbr.rel (%p186) target = $region32
        $region31: #{tpu_custom_call.1} parent=23 // pred_region
          %p189 = scmp.lt.s32.totalorder %s20, 1
          %s190 = scalar_select %p189, %s20, 1
          %p191 = scmp.lt.s32.totalorder %s21, 0
          %s192 = scalar_select %p191, %s21, 0
          %s193 = sadd.s32 %s192, %s190
          %s194 = smul.addr %s193, 2
          %s195 = scalar_lea.vmem %s1, %s194
        $region32: #{tpu_custom_call.1} parent=23 // pred_fallthru
          _
      $region24: #{tpu_custom_call.1} parent=5 // pred_fallthru
        _
      %p196 = scmp.le.s32.totalorder 1, %s13
      %p197 = scmp.lt.s32.totalorder %s13, 3
      %p198 = pnand %p196, %p197
      %p199 = pneg %p198
      // Predicated region
      $region33: #{tpu_custom_call.1} parent=5 // pred_check
        _
      $region34: #{tpu_custom_call.1} parent=5 // pred_check_branch
        %201 = sbr.rel (%p198) target = $region36
      $region35: #{tpu_custom_call.1} parent=5 // pred_region
        %s202 = ssub.s32 %s13, 1
        %p203 = scmp.lt.s32.totalorder %s22, 1
        %s204 = scalar_select %p203, %s22, 1
        %p205 = scmp.lt.s32.totalorder %s23, 0
        %s206 = scalar_select %p205, %s23, 0
        %s207 = sadd.s32 %s206, %s204
        %s208 = smul.addr %s207, 2
        %s209 = scalar_lea.vmem %s0, %s208
        %p210 = pneg %p53
        %p211 = pneg %p50
        %p212 = scmp.lt.s32.totalorder %s22, 1
        %s213 = scalar_select %p212, %s22, 1
        %p214 = scmp.lt.s32.totalorder %s23, 0
        %s215 = scalar_select %p214, %s23, 0
        %s216 = sadd.s32 %s215, %s213
        %s217 = smul.addr %s216, 2
        %s218 = scalar_lea.vmem %s1, %s217
        %p219 = pneg %p81
        %p220 = pneg %p78
        %p221 = pneg %p102
        %p222 = pneg %p99
        %p223 = pneg %p123
        %p224 = pneg %p120
        %p225 = pneg %p151
        %p226 = pneg %p148
        %s227 = sand.u32 %s138, 1
        %s228 = scalar_lea.sflag [#allocation3], %s227
        %s229 = sand.u32 %s138, 1
        %s230 = smul.addr %s229, 16
        %s231 = scalar_lea.vmem [#allocation2], %s230
        %p232 = scmp.lt.s32.totalorder %s22, 1
        %s233 = scalar_select %p232, %s22, 1
        %p234 = scmp.lt.s32.totalorder %s23, 0
        %s235 = scalar_select %p234, %s23, 0
        %s236 = sadd.s32 %s235, %s233
        %s237 = smul.addr %s236, 2
        %s238 = scalar_lea.vmem %s0, %s237
        %p239 = scmp.lt.s32.totalorder %s22, 1
        %s240 = scalar_select %p239, %s22, 1
        %p241 = scmp.lt.s32.totalorder %s23, 0
        %s242 = scalar_select %p241, %s23, 0
        %s243 = sadd.s32 %s242, %s240
        %s244 = smul.addr %s243, 2
        %s245 = scalar_lea.vmem %s1, %s244
        %v247 = vld [vmem:[%s238] sm:$0x3]
        %v248 = vld [vmem:[%s245] sm:$0x3]
        %v251 = vrot.slane %v247, 6
        %v252 = vrot.slane %v248, 6
        %253 = vrot.lane.b32.xlu0 %v251, 127
        %v254 = vpop.permute.xlu0 %253
        %255 = vrot.lane.b32.xlu0 %v252, 127
        %v256 = vpop.permute.xlu0 %255
        %vm257 = vcmask 1039360
        %v258 = vsel %vm257, %v254, %v256
        %v259 = vrot.slane %v247, 4
        %v260 = vrot.slane %v248, 4
        %261 = vrot.lane.b32.xlu0 %v259, 126
        %v262 = vpop.permute.xlu0 %261
        %263 = vrot.lane.b32.xlu0 %v260, 126
        %v264 = vpop.permute.xlu0 %263
        %vm265 = vcmask 1031168
        %v266 = vsel %vm265, %v262, %v264
        %vm267 = vcmask 1041408
        %v270 = vsel %vm267, %v247, %v258
        %vm271 = vcmask 1043456
        %v273 = vsel %vm271, %v270, %v266
        %v274 = vld [vmem:[%s2] sm:$0xf]
        %v275 = vld [vmem:[%s2 + $0x4] sm:$0xf]
        %v276 = vld [vmem:[%s3] sm:$0xff]
        %v277 = vld [vmem:[%s3 + $0x8] sm:$0xff]
        %279 = vset.pattern.permute.xlu0 0
        %280 = vperm.xlu0 %279, %v276
        %v281 = vpop.permute.xlu0 %280
        %284 = vset.pattern.permute.xlu0 0
        %285 = vperm.xlu0 %284, %v277
        %v286 = vpop.permute.xlu0 %285
        %v290 = vunpack.c.l.b16 %v274
        %v291 = vunpack.c.l.b16 %v275
        %v292 = vpack.c.b16 %v291, %v290
        %vm293 = vcmask 97280
        %v295 = vsel %vm293, %v292, 0
        %vm297 = vcmask 1045504
        %v298 = vsel %vm297, %v273, 0
        %300 = vmatprep.subr.bf16.mxu0 0
        %301 = vmatpush1.bf16.msra.mxu0 %v298
        %302 = vmatprep.subr.bf16.mxu0 0
        %303 = vmatpush1.bf16.msra.mxu0 0
        %304 = vmatprep.subr.bf16.mxu0 0
        %305 = vmatpush1.bf16.msra.mxu0 0
        %306 = vmatprep.subr.bf16.mxu0 0
        %307 = vmatpush1.bf16.msra.mxu0 0
        %308 = vmatprep.subr.bf16.mxu0 0
        %309 = vmatpush1.bf16.msra.mxu0 0
        %310 = vmatprep.subr.bf16.mxu0 0
        %311 = vmatpush1.bf16.msra.mxu0 0
        %312 = vmatprep.subr.bf16.mxu0 0
        %313 = vmatpush1.bf16.msra.mxu0 0
        %314 = vmatprep.subr.bf16.mxu0 0
        %315 = vmatpush1.bf16.msra.mxu0 0
        %316 = vmatprep.subr.bf16.mxu0 0
        %317 = vmatpush1.bf16.msra.mxu0 0
        %318 = vmatprep.subr.bf16.mxu0 0
        %319 = vmatpush1.bf16.msra.mxu0 0
        %320 = vmatprep.subr.bf16.mxu0 0
        %321 = vmatpush1.bf16.msra.mxu0 0
        %322 = vmatprep.subr.bf16.mxu0 0
        %323 = vmatpush1.bf16.msra.mxu0 0
        %324 = vmatprep.subr.bf16.mxu0 0
        %325 = vmatpush1.bf16.msra.mxu0 0
        %326 = vmatprep.subr.bf16.mxu0 0
        %327 = vmatpush1.bf16.msra.mxu0 0
        %328 = vmatprep.subr.bf16.mxu0 0
        %329 = vmatpush1.bf16.msra.mxu0 0
        %330 = vmatprep.subr.bf16.mxu0 0
        %331 = vmatpush1.bf16.msra.mxu0 0
        %332 = vmatprep.mubr.bf16.mxu0 0
        %333 = vmatmul.mubr.bf16.gmra.mrb[0].mxu0 %v295
        %v334 = vpop.f32.mrb[0].mxu0
        %v335 = vadd.f32 %v281, %v334
        %v336 = vpop.f32.mrb[0].mxu0
        %v337 = vpop.f32.mrb[0].mxu0
        %v338 = vadd.f32 %v286, %v337
        %v339 = vpop.f32.mrb[0].mxu0
        %340 = vdwg.mxu0
        %341 = vst [vmem:[%s231] sm:$0xff] %v335
        %342 = vst [vmem:[%s231 + $0x8] sm:$0xff] %v338
        %s343 = sand.u32 %s138, 1
        %s344 = scalar_lea.sflag [#allocation3], %s343
        %s345 = sand.u32 %s138, 1
        %s346 = smul.addr %s345, 16
        %s347 = scalar_lea.vmem [#allocation2], %s346
        // Predicated region
        $region37: #{tpu_custom_call.1} parent=35 // pred_check
          %p348 = pneg %p148
        $region38: #{tpu_custom_call.1} parent=35 // pred_check_branch
          %350 = sbr.rel (%p348) target = $region40
        $region39: #{tpu_custom_call.1} parent=35 // pred_region
          %s352 = ssub.s32 256, 256
          %353 = vsyncadd %s344, %s352
          %s354 = smul.addr %s22, 2
          %s355 = sadd.s32 %s23, %s354
          %s356 = smul.addr %s355, 128
          %s357 = scalar_lea.hbm %s4, %s356
          %s358 = sshll.u32 %s347, 4
          %s359 = int_to_ptr.vmem [resolvable:$true] %s358
          %364 = dma.vmem_to_hbm [thread:$0]  %s359, 256, %s357, %s344, 128, 128, 8
        $region40: #{tpu_custom_call.1} parent=35 // pred_fallthru
          _
      $region36: #{tpu_custom_call.1} parent=5 // pred_fallthru
        _
      %p365 = scmp.le.s32.totalorder 2, %s13
      // Predicated region
      $region41: #{tpu_custom_call.1} parent=5 // pred_check
        %p366 = pneg %p365
      $region42: #{tpu_custom_call.1} parent=5 // pred_check_branch
        %368 = sbr.rel (%p366) target = $region44
      $region43: #{tpu_custom_call.1} parent=5 // pred_region
        %s369 = ssub.s32 %s13, 2
        // Predicated region
        $region45: #{tpu_custom_call.1} parent=43 // pred_check
          %p370 = pneg %p154
        $region46: #{tpu_custom_call.1} parent=43 // pred_check_branch
          %372 = sbr.rel (%p370) target = $region48
        $region47: #{tpu_custom_call.1} parent=43 // pred_region
          %s373 = sand.u32 %s139, 1
          %s374 = scalar_lea.sflag [#allocation3], %s373
          %s375 = sand.u32 %s139, 1
          %s376 = smul.addr %s375, 16
          %s377 = scalar_lea.vmem [#allocation2], %s376
          %378 = dma.done %s374, 256
        $region48: #{tpu_custom_call.1} parent=43 // pred_fallthru
          _
      $region44: #{tpu_custom_call.1} parent=5 // pred_fallthru
        _
    $region6: #{tpu_custom_call.1} parent=1 // loop_footer
      %s17 = sadd.s32 1, %s13
    $region7: #{tpu_custom_call.1} parent=1 // loop_footer_branch
      %12 = sbr.rel target = $region3
    $region8: #{tpu_custom_call.1} parent=1 // loop_exit
      _
    %379 = vsyncpa [#allocation3], 1
    %s380 = scalar_lea.sflag [#allocation3], 1
    %381 = vsyncpa %s380, 1

</llo_original>
